<compile_context>
chip_gen: v7x
topology: tpu7x:2x2x1
jax: 0.10.0
libtpu: 0.0.40
codegen_flags: <defaults>
</compile_context>

<pallas_src>
import math

import jax
import jax.numpy as jnp
from jax.experimental import pallas as pl
from jax.experimental.pallas import tpu as pltpu


_BLOCK_BUDGET_BYTES = 2 * 1024 * 1024  # ~2 MiB per x block (in + out double-buffered)


def _shared_dropout_kernel(x_ref, m_ref, o_ref):
    # x_ref / o_ref: (TB, TS, H)   [batch_first]   or (TS, B, H) [seq-first]
    # m_ref:         (TB, 1,  H)                   or (1,  B, H)
    # Mask already contains the 1/(1-p) scale and is in x's dtype, so this is a
    # single broadcast multiply in the input dtype (no full-tile upcast).
    o_ref[...] = x_ref[...] * m_ref[...]


def _dropout_mask(key, p, shape, dtype):
    keep = jax.random.bernoulli(key, 1.0 - p, shape)
    scale = jnp.asarray(1.0 / (1.0 - p), dtype=dtype)
    return jnp.where(keep, scale, jnp.zeros((), dtype=dtype))


def shared_dropout(x, key, *, p=0.5, batch_first=True, training=True):
    """Pallas implementation of SharedDropout.forward.

    x:   (B, S, H) if batch_first else (S, B, H)
    key: jax.random.PRNGKey controlling the dropout mask.
    """
    p = float(p)
    if (not training) or p <= 0.0:
        return x
    if p >= 1.0:
        # PyTorch is degenerate here (divide by zero in the mask); drop everything.
        return jnp.zeros_like(x)

    itemsize = jnp.dtype(x.dtype).itemsize

    if batch_first:
        B, S, H = x.shape
        mask = _dropout_mask(key, p, (B, H), x.dtype)          # (B, H)

        # Lane-dense folding: present a >=128-wide last axis when possible.
        fold = 1
        if H % 128 != 0:
            f = 128 // math.gcd(H, 128)
            if S % f == 0:
                fold = f
        if fold > 1:
            x_k = x.reshape(B, S // fold, fold * H)
            mask_k = jnp.tile(mask, (1, fold))
        else:
            x_k, mask_k = x, mask
        Bk, Sk, Hk = x_k.shape
        mask_k = mask_k[:, None, :]                            # (B, 1, Hk)

        # VMEM-budgeted tiling.
        row_bytes = Sk * Hk * itemsize
        if row_bytes <= _BLOCK_BUDGET_BYTES:
            tb = max(1, min(Bk, _BLOCK_BUDGET_BYTES // max(row_bytes, 1)))
            ts = Sk
        else:
            tb = 1
            ts = max(8, (_BLOCK_BUDGET_BYTES // (Hk * itemsize)) // 8 * 8)
            ts = min(ts, Sk)
        grid = (pl.cdiv(Bk, tb), pl.cdiv(Sk, ts))

        out = pl.pallas_call(
            _shared_dropout_kernel,
            out_shape=jax.ShapeDtypeStruct((Bk, Sk, Hk), x.dtype),
            grid=grid,
            in_specs=[
                pl.BlockSpec((tb, ts, Hk), lambda bi, si: (bi, si, 0)),
                pl.BlockSpec((tb, 1, Hk), lambda bi, si: (bi, 0, 0)),
            ],
            out_specs=pl.BlockSpec((tb, ts, Hk), lambda bi, si: (bi, si, 0)),
            compiler_params=pltpu.CompilerParams(
                dimension_semantics=("parallel", "parallel"),
            ),
        )(x_k, mask_k)

        if fold > 1:
            out = out.reshape(B, S, H)
        return out

    # ---- batch_first = False: x is (S, B, H); no wrapper transposes. ----
    S, B, H = x.shape
    mask = _dropout_mask(key, p, (B, H), x.dtype)[None, :, :]   # (1, B, H)

    slab_bytes = B * H * itemsize
    ts = max(1, _BLOCK_BUDGET_BYTES // max(slab_bytes, 1))
    ts = min(ts, S)
    grid = (pl.cdiv(S, ts),)

    return pl.pallas_call(
        _shared_dropout_kernel,
        out_shape=jax.ShapeDtypeStruct((S, B, H), x.dtype),
        grid=grid,
        in_specs=[
            pl.BlockSpec((ts, B, H), lambda si: (si, 0, 0)),
            pl.BlockSpec((1, B, H), lambda si: (0, 0, 0)),
        ],
        out_specs=pl.BlockSpec((ts, B, H), lambda si: (si, 0, 0)),
        compiler_params=pltpu.CompilerParams(
            dimension_semantics=("parallel",),
        ),
    )(x, mask)


if __name__ == "__main__":
    root = jax.random.PRNGKey(0)
    kx, kmask = jax.random.split(root, 2)

    B, S, H = 2, 8, 32
    p = 0.5
    x = jax.random.normal(kx, (B, S, H), dtype=jnp.float32)

    # batch_first=True
    y = shared_dropout(x, kmask, p=p, batch_first=True, training=True)
    y = jax.block_until_ready(y)

    # Reference: same bernoulli draw as inside the wrapper.
    keep = jax.random.bernoulli(kmask, 1.0 - p, (B, H))
    ref = x * jnp.where(keep, 1.0 / (1.0 - p), 0.0).astype(x.dtype)[:, None, :]
    assert jnp.allclose(y, ref), "batch_first output mismatch"

    # Mask must be shared across the sequence axis.
    zero_pat = jnp.abs(y) < 1e-7
    assert bool(jnp.all(zero_pat == zero_pat[:, :1, :])), "mask not shared over seq"

    # batch_first=False (layout handled via BlockSpec, no transposes in wrapper)
    x_sf = jnp.transpose(x, (1, 0, 2))  # build a (S, B, H) input for the test
    y_sf = shared_dropout(x_sf, kmask, p=p, batch_first=False, training=True)
    y_sf = jax.block_until_ready(y_sf)
    assert jnp.allclose(jnp.transpose(y_sf, (1, 0, 2)), ref), "seq-first mismatch"

    # eval mode is identity
    y_eval = shared_dropout(x, kmask, p=p, training=False)
    assert bool(jnp.all(y_eval == x)), "eval mode must be identity"

    print("KERNEL_OK")
</pallas_src>

<mosaic_0001>
module attributes {stable_mosaic.version = 11 : i64} {
  func.func @_shared_dropout_kernel(%arg0: i32, %arg1: i32, %arg2: memref<2x2x128xf32, #tpu.memory_space<vmem>>, %arg3: memref<2x1x128xf32, #tpu.memory_space<vmem>>, %arg4: memref<2x2x128xf32, #tpu.memory_space<vmem>>) attributes {dimension_semantics = [#tpu.dimension_semantics<parallel>, #tpu.dimension_semantics<parallel>], iteration_bounds = array<i64: 1, 1>, scalar_prefetch = 0 : i64, scratch_operands = 0 : i64, tpu.core_type = #tpu.core_type<tc>, window_params = [{transform_indices = @transform_0, window_bounds = array<i64: 2, 2, 128>}, {transform_indices = @transform_1, window_bounds = array<i64: 2, 1, 128>}, {transform_indices = @transform_2, window_bounds = array<i64: 2, 2, 128>}]} {
    %c0 = arith.constant 0 : index
    %c0_0 = arith.constant 0 : index
    %c0_1 = arith.constant 0 : index
    %0 = vector.load %arg2[%c0, %c0_0, %c0_1] : memref<2x2x128xf32, #tpu.memory_space<vmem>>, vector<2x2x128xf32>
    %c0_2 = arith.constant 0 : index
    %c0_3 = arith.constant 0 : index
    %c0_4 = arith.constant 0 : index
    %1 = vector.load %arg3[%c0_2, %c0_3, %c0_4] : memref<2x1x128xf32, #tpu.memory_space<vmem>>, vector<2x1x128xf32>
    %2 = vector.broadcast %1 : vector<2x1x128xf32> to vector<2x2x128xf32>
    %3 = arith.mulf %0, %2 : vector<2x2x128xf32>
    %c0_5 = arith.constant 0 : index
    %c0_6 = arith.constant 0 : index
    %c0_7 = arith.constant 0 : index
    %4 = vector.load %arg4[%c0_5, %c0_6, %c0_7] : memref<2x2x128xf32, #tpu.memory_space<vmem>>, vector<2x2x128xf32>
    tpu.vector_store %arg4[%c0_5, %c0_6, %c0_7], %3 {strides = array<i32>} : memref<2x2x128xf32, #tpu.memory_space<vmem>>, vector<2x2x128xf32>,
    return
  }
  func.func @transform_0(%arg0: i32, %arg1: i32) -> (i32, i32, i32) {
    %c0_i32 = arith.constant 0 : i32
    %c0_i32_0 = arith.constant 0 : i32
    return %arg0, %arg1, %c0_i32 : i32, i32, i32
  }
  func.func @transform_1(%arg0: i32, %arg1: i32) -> (i32, i32, i32) {
    %c0_i32 = arith.constant 0 : i32
    %c0_i32_0 = arith.constant 0 : i32
    %c0_i32_1 = arith.constant 0 : i32
    return %arg0, %c0_i32, %c0_i32_0 : i32, i32, i32
  }
  func.func @transform_2(%arg0: i32, %arg1: i32) -> (i32, i32, i32) {
    %c0_i32 = arith.constant 0 : i32
    %c0_i32_0 = arith.constant 0 : i32
    return %arg0, %arg1, %c0_i32 : i32, i32, i32
  }
}

</mosaic_0001>

<llo_original>
// kernel: tpu_custom_call.1
$region0: #{tpu_custom_call.1}
  #allocation0 [shape = 'u32[]', space=smem, size = 0x4, offset = 0x4, fixed_abs, tag = 'smem constant byte address 0x4 - core index']
  #allocation1 [shape = 'u32[144,128]{1,0:T(1,128)}', space=vmem, size = 0x12000, scoped, tag = 'internal scratch']
  %s0 = inlined_call_operand.hbm [shape: f32[2,2,128], index: 0, kind: input, shape index: {}]
  %s1 = inlined_call_operand.vmem [shape: f32[2,1,128], index: 1, kind: input, shape index: {}]
  %s2 = inlined_call_operand.hbm [shape: f32[2,2,128], index: 2, kind: output, shape index: {}]
  %s3 = sld [smem:[#allocation0]]
  $region22: #{tpu_custom_call.1} parent=0
    _
  %s5 = ssub.s32 1, %s3
  %s6 = scalar_select 0, %s5, %s3
  $region1: #{tpu_custom_call.1} parent=0
    #allocation2 [shape = 'u8[2048]{0}', space=vmem, size = 0x800, scoped, tag = 'input window, operand 0, single buffered']
    #allocation3 [shape = 's32[1]{0}', space=sflag, size = 0x4, scoped, tag = 'scoped memory for tpu_custom_call.1']
    #allocation4 [shape = 's32[1]{0}', space=sflag, size = 0x4, scoped, tag = 'scoped memory for tpu_custom_call.1']
    #allocation5 [shape = 'u8[2048]{0}', space=vmem, size = 0x800, scoped, tag = 'output window, operand 0, single buffered']
    %7 = vsyncpa [#allocation3], 0
    %8 = vsyncpa [#allocation4], 0
    // Predicated region
    $region2: #{tpu_custom_call.1} parent=1 // pred_check
      _
    $region3: #{tpu_custom_call.1} parent=1 // pred_check_branch
      %10 = sbr.rel (0) target = $region5
    $region4: #{tpu_custom_call.1} parent=1 // pred_region
      %s12 = ssub.s32 64, 64
      %13 = vsyncadd [#allocation3], %s12
      %s14 = sshll.u32 [#allocation2], 4
      %s15 = int_to_ptr.vmem [resolvable:$true] %s14
      %20 = dma.hbm_to_vmem [thread:$0]  %s0, 64, %s15, [#allocation3], 32, 32, 2
    $region5: #{tpu_custom_call.1} parent=1 // pred_fallthru
      _
    // Predicated region
    $region6: #{tpu_custom_call.1} parent=1 // pred_check
      _
    $region7: #{tpu_custom_call.1} parent=1 // pred_check_branch
      %22 = sbr.rel (0) target = $region9
    $region8: #{tpu_custom_call.1} parent=1 // pred_region
      _
    $region9: #{tpu_custom_call.1} parent=1 // pred_fallthru
      _
    // Predicated region
    $region10: #{tpu_custom_call.1} parent=1 // pred_check
      _
    $region11: #{tpu_custom_call.1} parent=1 // pred_check_branch
      %24 = sbr.rel (0) target = $region13
    $region12: #{tpu_custom_call.1} parent=1 // pred_region
      %25 = dma.done [#allocation3], 64
    $region13: #{tpu_custom_call.1} parent=1 // pred_fallthru
      _
    %v26 = vld [vmem:[#allocation2] sm:$0x3]
    %v27 = vld [vmem:[#allocation2 + $0x2] sm:$0x3]
    %v28 = vld [vmem:[%s1] sm:$0x1]
    %v29 = vld [vmem:[%s1 + $0x1] sm:$0x1]
    %v32 = vlaneseq
    %v33 = vshrl.u32 %v32, 7
    %v34 = vsub.s32 0, %v33
    %v35 = vrot.slane %v28, %v34
    %v36 = vlaneseq
    %v37 = vshrl.u32 %v36, 7
    %v38 = vsub.s32 0, %v37
    %v39 = vrot.slane %v29, %v38
    %v42 = vmul.f32 %v26, %v35
    %v43 = vmul.f32 %v27, %v39
    %44 = vst [vmem:[#allocation5] sm:$0x3] %v42
    %45 = vst [vmem:[#allocation5 + $0x2] sm:$0x3] %v43
    // Predicated region
    $region14: #{tpu_custom_call.1} parent=1 // pred_check
      _
    $region15: #{tpu_custom_call.1} parent=1 // pred_check_branch
      %47 = sbr.rel (0) target = $region17
    $region16: #{tpu_custom_call.1} parent=1 // pred_region
      %s49 = ssub.s32 64, 64
      %50 = vsyncadd [#allocation4], %s49
      %s51 = sshll.u32 [#allocation5], 4
      %s52 = int_to_ptr.vmem [resolvable:$true] %s51
      %57 = dma.vmem_to_hbm [thread:$0]  %s52, 64, %s2, [#allocation4], 32, 32, 2
    $region17: #{tpu_custom_call.1} parent=1 // pred_fallthru
      _
    // Predicated region
    $region18: #{tpu_custom_call.1} parent=1 // pred_check
      _
    $region19: #{tpu_custom_call.1} parent=1 // pred_check_branch
      %59 = sbr.rel (0) target = $region21
    $region20: #{tpu_custom_call.1} parent=1 // pred_region
      %60 = dma.done [#allocation4], 64
    $region21: #{tpu_custom_call.1} parent=1 // pred_fallthru
      _
    %61 = vsyncpa [#allocation3], 1
    %62 = vsyncpa [#allocation4], 1

</llo_original>
